<compile_context>
chip_gen: v7x
topology: tpu7x:2x2x1
jax: 0.10.0
libtpu: 0.0.40
codegen_flags: <defaults>
</compile_context>

<pallas_src>
import functools
import math

import jax
import jax.numpy as jnp
from jax.experimental import pallas as pl
from jax.experimental.pallas import tpu as pltpu


def _round_up(v, m):
    return ((v + m - 1) // m) * m


# ------------------------------- kernel ------------------------------------

def _add_pe_kernel(x_ref, pe_ref, o_ref):
    # x_ref : (TL, TN, E)   pe_ref : (TL, E)   o_ref : (TL, TN, E)
    # pe row is broadcast over the batch (sublane) dim in-register; the add
    # runs in f32 when pe is f32 (matches PyTorch: f32 buffer add, then the
    # result is stored in the activation dtype).
    pe = pe_ref[...][:, None, :]
    o_ref[...] = (x_ref[...] + pe).astype(o_ref.dtype)


# ------------------------------- wrapper ------------------------------------

@functools.partial(
    jax.jit,
    static_argnames=("block_rows", "block_batch",
                     "vmem_budget_bytes", "vmem_limit_bytes"),
    donate_argnums=(0,))
def positional_encoding_forward(x, pe, *, block_rows=None, block_batch=None,
                                vmem_budget_bytes=40 * 1024 * 1024,
                                vmem_limit_bytes=48 * 1024 * 1024):
    """x: (L, N, E) seq-first activations; pe: (max_len, E) sin/cos buffer.

    NOTE: x is donated (its HBM buffer is reused for the output via
    input_output_aliases).  Defaults target v7x's 64 MiB per-TC VMEM; raise
    both byte knobs on v5e/v6e for slightly larger tiles.
    """
    L, N, E = x.shape
    if pe.ndim == 3:                      # accept the PyTorch (max_len, 1, E) buffer
        pe = pe.reshape(pe.shape[0], pe.shape[-1])

    x_b = x.dtype.itemsize
    pe_b = pe.dtype.itemsize

    # ---- tile-size heuristic ------------------------------------------------
    # Double-buffered resident set ~= 2*(x tile) + 2*(out tile) + 2*(pe tile).
    if block_batch is None:
        row_cost = 2 * (2 * N * E * x_b + E * pe_b)    # resident bytes per seq row
        if 8 * row_cost <= vmem_budget_bytes or N <= 8:
            block_batch = N
        else:
            # A single (N, E) row-slab blows the budget: tile the batch dim too.
            avail = vmem_budget_bytes // 2 - 8 * E * pe_b
            bn = max(1, avail // (2 * 8 * E * x_b))
            block_batch = max(8, min(N, (bn // 8) * 8))
    # TODO(synk): no fallback tiling over E; gigantic E with tiny N could still
    # exceed the VMEM budget.

    if block_rows is None:
        row_cost = 2 * (2 * block_batch * E * x_b + E * pe_b)
        br = max(1, vmem_budget_bytes // row_cost)
        br = max(8, (br // 8) * 8)        # pe block (rows, E) needs rows % 8 == 0
        br = min(br, _round_up(L, 8))
        # Keep >=2 grid steps when the shape allows it so both v7x TensorCores
        # ("parallel" grid axes) stream their half.
        if br >= L and block_batch >= N and L >= 16:
            br = _round_up(pl.cdiv(L, 2), 8)
        block_rows = br

    grid = (pl.cdiv(L, block_rows), pl.cdiv(N, block_batch))

    out = pl.pallas_call(
        _add_pe_kernel,
        out_shape=jax.ShapeDtypeStruct((L, N, E), x.dtype),
        grid=grid,
        in_specs=[
            pl.BlockSpec((block_rows, block_batch, E), lambda i, j: (i, j, 0)),
            # pe[:L] slicing is implicit: the grid only touches the first
            # ceil(L/block_rows) row-blocks of the (max_len, E) buffer.
            pl.BlockSpec((block_rows, E), lambda i, j: (i, 0)),
        ],
        out_specs=pl.BlockSpec((block_rows, block_batch, E),
                               lambda i, j: (i, j, 0)),
        input_output_aliases={0: 0},       # output overwrites x's HBM buffer
        compiler_params=pltpu.CompilerParams(
            dimension_semantics=("parallel", "parallel"),
            vmem_limit_bytes=vmem_limit_bytes),
    )(x, pe)
    # TODO(synk): dropout(p=0.1) skipped (identity, inference semantics).
    return out


# --------------------------- buffer construction ----------------------------

def make_pe(max_len, d_model, dtype=jnp.float32):
    """PyTorch buffer values: pe[:,0::2]=sin, pe[:,1::2]=cos.

    Returned as a dense 2D (max_len, d_model) table in the model dtype; the
    PyTorch buffer's size-1 batch dim existed only for broadcasting.
    """
    position = jnp.arange(max_len, dtype=jnp.float32)[:, None]
    div_term = jnp.exp(jnp.arange(0, d_model, 2, dtype=jnp.float32)
                       * (-math.log(10000.0) / d_model))
    pe = jnp.zeros((max_len, d_model), jnp.float32)
    pe = pe.at[:, 0::2].set(jnp.sin(position * div_term))
    pe = pe.at[:, 1::2].set(jnp.cos(position * div_term))
    return pe.astype(dtype)


# ----------------------------------- main ------------------------------------

if __name__ == "__main__":
    d_model, max_len = 128, 100        # lane-dense last dim (multiple of 128)
    L, N = 16, 4                       # seq-first (L, N, E)

    key = jax.random.PRNGKey(0)
    x = jax.random.normal(key, (L, N, d_model), jnp.float32)
    pe = make_pe(max_len, d_model)

    # Reference computed BEFORE the kernel call: x is donated into the jit
    # (its HBM buffer is reused for the output).
    ref = x + pe[:L][:, None, :]

    out = positional_encoding_forward(x, pe)   # heuristic -> block_rows=8, grid (2, 1)
    out = jax.block_until_ready(out)

    assert out.shape == (L, N, d_model), out.shape
    assert bool(jnp.all(jnp.isfinite(out)))
    assert bool(jnp.allclose(out, ref, atol=1e-6, rtol=1e-6))
    print("KERNEL_OK")
</pallas_src>

<mosaic_0001>
module attributes {stable_mosaic.version = 11 : i64} {
  func.func @_add_pe_kernel(%arg0: i32, %arg1: i32, %arg2: memref<8x4x128xf32, #tpu.memory_space<vmem>>, %arg3: memref<8x128xf32, #tpu.memory_space<vmem>>, %arg4: memref<8x4x128xf32, #tpu.memory_space<vmem>>) attributes {dimension_semantics = [#tpu.dimension_semantics<parallel>, #tpu.dimension_semantics<parallel>], iteration_bounds = array<i64: 2, 1>, scalar_prefetch = 0 : i64, scratch_operands = 0 : i64, tpu.core_type = #tpu.core_type<tc>, window_params = [{transform_indices = @transform_0, window_bounds = array<i64: 8, 4, 128>}, {transform_indices = @transform_1, window_bounds = array<i64: 8, 128>}, {transform_indices = @transform_2, window_bounds = array<i64: 8, 4, 128>}]} {
    %c0 = arith.constant 0 : index
    %c0_0 = arith.constant 0 : index
    %0 = vector.load %arg3[%c0, %c0_0] : memref<8x128xf32, #tpu.memory_space<vmem>>, vector<8x128xf32>
    %1 = vector.shape_cast %0 : vector<8x128xf32> to vector<8x1x128xf32>
    %c0_1 = arith.constant 0 : index
    %c0_2 = arith.constant 0 : index
    %c0_3 = arith.constant 0 : index
    %2 = vector.load %arg2[%c0_1, %c0_2, %c0_3] : memref<8x4x128xf32, #tpu.memory_space<vmem>>, vector<8x4x128xf32>
    %3 = vector.broadcast %1 : vector<8x1x128xf32> to vector<8x4x128xf32>
    %4 = arith.addf %2, %3 : vector<8x4x128xf32>
    %c0_4 = arith.constant 0 : index
    %c0_5 = arith.constant 0 : index
    %c0_6 = arith.constant 0 : index
    %5 = vector.load %arg4[%c0_4, %c0_5, %c0_6] : memref<8x4x128xf32, #tpu.memory_space<vmem>>, vector<8x4x128xf32>
    tpu.vector_store %arg4[%c0_4, %c0_5, %c0_6], %4 {strides = array<i32>} : memref<8x4x128xf32, #tpu.memory_space<vmem>>, vector<8x4x128xf32>,
    return
  }
  func.func @transform_0(%arg0: i32, %arg1: i32) -> (i32, i32, i32) {
    %c0_i32 = arith.constant 0 : i32
    %c0_i32_0 = arith.constant 0 : i32
    return %arg0, %arg1, %c0_i32 : i32, i32, i32
  }
  func.func @transform_1(%arg0: i32, %arg1: i32) -> (i32, i32) {
    %c0_i32 = arith.constant 0 : i32
    %c0_i32_0 = arith.constant 0 : i32
    return %arg0, %c0_i32 : i32, i32
  }
  func.func @transform_2(%arg0: i32, %arg1: i32) -> (i32, i32, i32) {
    %c0_i32 = arith.constant 0 : i32
    %c0_i32_0 = arith.constant 0 : i32
    return %arg0, %arg1, %c0_i32 : i32, i32, i32
  }
}

</mosaic_0001>

<llo_original>
// kernel: positional_encoding_forward.1
$region0: #{positional_encoding_forward.1}
  #allocation0 [shape = 'u32[]', space=smem, size = 0x4, offset = 0x4, fixed_abs, tag = 'smem constant byte address 0x4 - core index']
  #allocation1 [shape = 'u32[144,128]{1,0:T(1,128)}', space=vmem, size = 0x12000, scoped, tag = 'internal scratch']
  %s0 = inlined_call_operand.hbm [shape: f32[16,4,128], index: 0, kind: input, shape index: {}, may-alias: {0,2}]
  %s1 = inlined_call_operand.hbm [shape: f32[100,128], index: 1, kind: input, shape index: {}]
  %s2 = inlined_call_operand.hbm [shape: f32[16,4,128], index: 2, kind: output, shape index: {}, may-alias: {0,2}]
  %s3 = sld [smem:[#allocation0]]
  $region49: #{positional_encoding_forward.1} parent=0
    _
  %s5 = ssub.s32 1, %s3
  %s6 = scalar_select 0, %s5, %s3
  $region1: #{positional_encoding_forward.1} parent=0
    #allocation2 [shape = 'u8[32768]{0}', space=vmem, size = 0x8000, scoped, tag = 'input window, operand 0']
    #allocation3 [shape = 's32[2]{0}', space=sflag, size = 0x8, scoped, tag = 'scoped memory for positional_encoding_forward.1']
    #allocation4 [shape = 's32[2]{0}', space=sflag, size = 0x8, scoped, tag = 'scoped memory for positional_encoding_forward.1']
    #allocation5 [shape = 'u8[8192]{0}', space=vmem, size = 0x2000, scoped, tag = 'input window, operand 1']
    #allocation6 [shape = 's32[2]{0}', space=sflag, size = 0x8, scoped, tag = 'scoped memory for positional_encoding_forward.1']
    #allocation7 [shape = 'u8[32768]{0}', space=vmem, size = 0x8000, scoped, tag = 'output window, operand 0']
    %7 = vsyncpa [#allocation3], 0
    %s8 = scalar_lea.sflag [#allocation3], 1
    %9 = vsyncpa %s8, 0
    %10 = vsyncpa [#allocation6], 0
    %s11 = scalar_lea.sflag [#allocation6], 1
    %12 = vsyncpa %s11, 0
    %13 = vsyncpa [#allocation4], 0
    %s14 = scalar_lea.sflag [#allocation4], 1
    %15 = vsyncpa %s14, 0
    loop: start=0, step=1, limit=4
    $region2: #{positional_encoding_forward.1} parent=1 // loop_pre_header
      _
    $region3: #{positional_encoding_forward.1} parent=1 // loop_header
      %s17 = sphi 0, %s21
      %p18 = scmp.ge.s32.totalorder %s17, 4
      %s24 = sphi 0, %s36
      %s25 = sphi 0, %s32
      %s26 = sphi 0, %s24
      %s27 = sphi 0, %s25
      %s28 = sphi 0, %s26
      %s29 = sphi 0, %s27
      %s41 = sphi 0, %s43
      %s44 = sphi 0, %s41
      %s45 = sphi 0, %s44
      %s61 = sphi 0, %s45
      %s67 = sphi 0, %s69
      %s70 = sphi 0, %s67
      %s71 = sphi 0, %s70
      %s87 = sphi 0, %s71
      %s95 = sphi 0, %s97
      %s98 = sphi 0, %s95
      %s99 = sphi 0, %s98
      %s115 = sphi 0, %s99
    $region4: #{positional_encoding_forward.1} parent=1 // loop_header_branch
      %20 = sbr.rel (%p18) target = $region8
    $region5: #{positional_encoding_forward.1} parent=1 // loop_body
      %s22 = ssub.s32 %s17, 1
      %s23 = ssub.s32 %s17, 2
      %s30 = sadd.s32 1, %s25
      %p31 = scmp.ge.s32.totalorder %s30, 1
      %s32 = scalar_select %p31, 0, %s30
      %s33 = sadd.s32 1, %s24
      %s34 = scalar_select %p31, %s33, %s24
      %p35 = scmp.ge.s32.totalorder %s34, 2
      %s36 = scalar_select %p35, 0, %s34
      %s37 = ssub.s32 %s24, %s36
      %s38 = ssub.s32 %s25, %s32
      %s39 = sor.u32 %s37, %s38
      %p40 = scmp.eq.s32.totalorder %s39, 0
      %s42 = sadd.s32 %s41, 1
      %s43 = scalar_select %p40, %s41, %s42
      %p46 = pneg %p40
      %p47 = scmp.eq.s32.totalorder %s17, 1
      %p48 = por %p46, %p47
      %p49 = scmp.ne.s32.totalorder %s41, %s44
      %p50 = scmp.eq.s32.totalorder %s17, 0
      %p51 = por %p49, %p50
      %p52 = scmp.ne.s32.totalorder %s41, %s44
      %p53 = scmp.eq.s32.totalorder %s22, 1
      %p54 = por %p52, %p53
      %p55 = scmp.ne.s32.totalorder %s44, %s45
      %p56 = scmp.eq.s32.totalorder %s22, 0
      %p57 = por %p55, %p56
      %p58 = scmp.ne.s32.totalorder %s44, %s45
      %p59 = scmp.eq.s32.totalorder %s23, 1
      %p60 = por %p58, %p59
      %p62 = scmp.ne.s32.totalorder %s45, %s61
      %p63 = scmp.eq.s32.totalorder %s23, 0
      %p64 = por %p62, %p63
      %s65 = ssub.s32 %s24, %s36
      %p66 = scmp.eq.s32.totalorder %s65, 0
      %s68 = sadd.s32 %s67, 1
      %s69 = scalar_select %p66, %s67, %s68
      %p72 = pneg %p66
      %p73 = scmp.eq.s32.totalorder %s17, 1
      %p74 = por %p72, %p73
      %p75 = scmp.ne.s32.totalorder %s67, %s70
      %p76 = scmp.eq.s32.totalorder %s17, 0
      %p77 = por %p75, %p76
      %p78 = scmp.ne.s32.totalorder %s67, %s70
      %p79 = scmp.eq.s32.totalorder %s22, 1
      %p80 = por %p78, %p79
      %p81 = scmp.ne.s32.totalorder %s70, %s71
      %p82 = scmp.eq.s32.totalorder %s22, 0
      %p83 = por %p81, %p82
      %p84 = scmp.ne.s32.totalorder %s70, %s71
      %p85 = scmp.eq.s32.totalorder %s23, 1
      %p86 = por %p84, %p85
      %p88 = scmp.ne.s32.totalorder %s71, %s87
      %p89 = scmp.eq.s32.totalorder %s23, 0
      %p90 = por %p88, %p89
      %s91 = ssub.s32 %s24, %s36
      %s92 = ssub.s32 %s25, %s32
      %s93 = sor.u32 %s91, %s92
      %p94 = scmp.eq.s32.totalorder %s93, 0
      %s96 = sadd.s32 %s95, 1
      %s97 = scalar_select %p94, %s95, %s96
      %p100 = pneg %p94
      %p101 = scmp.eq.s32.totalorder %s17, 1
      %p102 = por %p100, %p101
      %p103 = scmp.ne.s32.totalorder %s95, %s98
      %p104 = scmp.eq.s32.totalorder %s17, 0
      %p105 = por %p103, %p104
      %p106 = scmp.ne.s32.totalorder %s95, %s98
      %p107 = scmp.eq.s32.totalorder %s22, 1
      %p108 = por %p106, %p107
      %p109 = scmp.ne.s32.totalorder %s98, %s99
      %p110 = scmp.eq.s32.totalorder %s22, 0
      %p111 = por %p109, %p110
      %p112 = scmp.ne.s32.totalorder %s98, %s99
      %p113 = scmp.eq.s32.totalorder %s23, 1
      %p114 = por %p112, %p113
      %p116 = scmp.ne.s32.totalorder %s99, %s115
      %p117 = scmp.eq.s32.totalorder %s23, 0
      %p118 = por %p116, %p117
      %p119 = scmp.le.s32.totalorder 1, %s17
      %p120 = scmp.lt.s32.totalorder %s17, 3
      %p121 = pnand %p119, %p120
      %p122 = pneg %p121
      // Predicated region
      $region9: #{positional_encoding_forward.1} parent=5 // pred_check
        _
      $region10: #{positional_encoding_forward.1} parent=5 // pred_check_branch
        %124 = sbr.rel (%p121) target = $region12
      $region11: #{positional_encoding_forward.1} parent=5 // pred_region
        %s125 = ssub.s32 %s17, 1
      $region12: #{positional_encoding_forward.1} parent=5 // pred_fallthru
        _
      %p126 = scmp.lt.s32.totalorder %s17, 2
      // Predicated region
      $region13: #{positional_encoding_forward.1} parent=5 // pred_check
        %p127 = pneg %p126
      $region14: #{positional_encoding_forward.1} parent=5 // pred_check_branch
        %129 = sbr.rel (%p127) target = $region16
      $region15: #{positional_encoding_forward.1} parent=5 // pred_region
        // Predicated region
        $region17: #{positional_encoding_forward.1} parent=15 // pred_check
          %p130 = pneg %p51
        $region18: #{positional_encoding_forward.1} parent=15 // pred_check_branch
          %132 = sbr.rel (%p130) target = $region20
        $region19: #{positional_encoding_forward.1} parent=15 // pred_region
          %s133 = sand.u32 %s41, 1
          %s134 = scalar_lea.sflag [#allocation3], %s133
          %s135 = sand.u32 %s41, 1
          %s136 = smul.addr %s135, 32
          %s137 = scalar_lea.vmem [#allocation2], %s136
          %s138 = smul.u32 8, %s24
          %s140 = ssub.s32 512, 512
          %141 = vsyncadd %s134, %s140
          %s142 = sadd.s32 %s25, %s138
          %s143 = smul.addr %s142, 64
          %s144 = scalar_lea.hbm %s0, %s143
          %s145 = sshll.u32 %s137, 4
          %s146 = int_to_ptr.vmem [resolvable:$true] %s145
          %151 = dma.hbm_to_vmem [thread:$0]  %s144, 512, %s146, %s134, 64, 64, 4
        $region20: #{positional_encoding_forward.1} parent=15 // pred_fallthru
          _
        // Predicated region
        $region21: #{positional_encoding_forward.1} parent=15 // pred_check
          %p152 = pneg %p77
        $region22: #{positional_encoding_forward.1} parent=15 // pred_check_branch
          %154 = sbr.rel (%p152) target = $region24
        $region23: #{positional_encoding_forward.1} parent=15 // pred_region
          %s155 = sand.u32 %s67, 1
          %s156 = scalar_lea.sflag [#allocation6], %s155
          %s157 = sand.u32 %s67, 1
          %s158 = smul.addr %s157, 8
          %s159 = scalar_lea.vmem [#allocation5], %s158
          %s161 = ssub.s32 128, 128
          %162 = vsyncadd %s156, %s161
          %s163 = smul.addr %s24, 128
          %s164 = scalar_lea.hbm %s1, %s163
          %s166 = sshll.u32 %s159, 4
          %s167 = int_to_ptr.vmem [resolvable:$true] %s166
          %169 = dma.hbm_to_vmem [thread:$0]  %s164, 128, %s167, %s156
        $region24: #{positional_encoding_forward.1} parent=15 // pred_fallthru
          _
      $region16: #{positional_encoding_forward.1} parent=5 // pred_fallthru
        _
      %p170 = scmp.le.s32.totalorder 1, %s17
      %p171 = scmp.lt.s32.totalorder %s17, 3
      %p172 = pnand %p170, %p171
      %p173 = pneg %p172
      // Predicated region
      $region25: #{positional_encoding_forward.1} parent=5 // pred_check
        _
      $region26: #{positional_encoding_forward.1} parent=5 // pred_check_branch
        %175 = sbr.rel (%p172) target = $region28
      $region27: #{positional_encoding_forward.1} parent=5 // pred_region
        %s176 = ssub.s32 %s17, 1
        %s177 = sand.u32 %s44, 1
        %s178 = scalar_lea.sflag [#allocation3], %s177
        %s179 = sand.u32 %s44, 1
        %s180 = smul.addr %s179, 32
        %s181 = scalar_lea.vmem [#allocation2], %s180
        // Predicated region
        $region29: #{positional_encoding_forward.1} parent=27 // pred_check
          %p182 = pneg %p57
        $region30: #{positional_encoding_forward.1} parent=27 // pred_check_branch
          %184 = sbr.rel (%p182) target = $region32
        $region31: #{positional_encoding_forward.1} parent=27 // pred_region
          %185 = dma.done %s178, 512
        $region32: #{positional_encoding_forward.1} parent=27 // pred_fallthru
          _
        %s186 = sand.u32 %s70, 1
        %s187 = scalar_lea.sflag [#allocation6], %s186
        %s188 = sand.u32 %s70, 1
        %s189 = smul.addr %s188, 8
        %s190 = scalar_lea.vmem [#allocation5], %s189
        // Predicated region
        $region33: #{positional_encoding_forward.1} parent=27 // pred_check
          %p191 = pneg %p83
        $region34: #{positional_encoding_forward.1} parent=27 // pred_check_branch
          %193 = sbr.rel (%p191) target = $region36
        $region35: #{positional_encoding_forward.1} parent=27 // pred_region
          %194 = dma.done %s187, 128
        $region36: #{positional_encoding_forward.1} parent=27 // pred_fallthru
          _
        %s195 = sand.u32 %s44, 1
        %s196 = scalar_lea.sflag [#allocation3], %s195
        %s197 = sand.u32 %s44, 1
        %s198 = smul.addr %s197, 32
        %s199 = scalar_lea.vmem [#allocation2], %s198
        %p200 = pneg %p57
        %p201 = pneg %p54
        %s202 = sand.u32 %s70, 1
        %s203 = scalar_lea.sflag [#allocation6], %s202
        %s204 = sand.u32 %s70, 1
        %s205 = smul.addr %s204, 8
        %s206 = scalar_lea.vmem [#allocation5], %s205
        %p207 = pneg %p83
        %p208 = pneg %p80
        %p209 = pneg %p111
        %p210 = pneg %p108
        %s211 = sand.u32 %s98, 1
        %s212 = scalar_lea.sflag [#allocation4], %s211
        %s213 = sand.u32 %s98, 1
        %s214 = smul.addr %s213, 32
        %s215 = scalar_lea.vmem [#allocation7], %s214
        %s216 = smul.u32 8, %s26
        %s217 = smul.u32 8, %s26
        %v218 = vld [vmem:[%s190] sm:$0xff]
        %v220 = vcombine.high %v218, %v218
        %v222 = vunpack.c.l.s4 1966171168
        %v223 = vunpack.c.0.s8 %v222
        %v224 = vlaneseq
        %v225 = vshrl.u32 %v224, 7
        %v226 = vsub.s32 %v223, %v225
        %v227 = vrot.slane %v218, %v226
        %v229 = vunpack.c.l.s4 1966171168
        %v230 = vunpack.c.0.s8 %v229
        %v231 = vlaneseq
        %v232 = vshrl.u32 %v231, 7
        %v233 = vsub.s32 %v230, %v232
        %v234 = vrot.slane %v220, %v233
        %v235 = vcombine.high %v227, %v227
        %v236 = vcombine.high %v234, %v234
        %v238 = vunpack.c.l.s4 1966171168
        %v239 = vunpack.c.0.s8 %v238
        %v240 = vlaneseq
        %v241 = vshrl.u32 %v240, 7
        %v242 = vsub.s32 %v239, %v241
        %v243 = vrot.slane %v227, %v242
        %v245 = vunpack.c.l.s4 1966171168
        %v246 = vunpack.c.0.s8 %v245
        %v247 = vlaneseq
        %v248 = vshrl.u32 %v247, 7
        %v249 = vsub.s32 %v246, %v248
        %v250 = vrot.slane %v234, %v249
        %v252 = vunpack.c.l.s4 1966171168
        %v253 = vunpack.c.0.s8 %v252
        %v254 = vlaneseq
        %v255 = vshrl.u32 %v254, 7
        %v256 = vsub.s32 %v253, %v255
        %v257 = vrot.slane %v235, %v256
        %v259 = vunpack.c.l.s4 1966171168
        %v260 = vunpack.c.0.s8 %v259
        %v261 = vlaneseq
        %v262 = vshrl.u32 %v261, 7
        %v263 = vsub.s32 %v260, %v262
        %v264 = vrot.slane %v236, %v263
        %v265 = vcombine.high %v243, %v243
        %v266 = vcombine.high %v250, %v250
        %v267 = vcombine.high %v257, %v257
        %v268 = vcombine.high %v264, %v264
        %v269 = vld [vmem:[%s181] sm:$0xf]
        %v270 = vld [vmem:[%s181 + $0x4] sm:$0xf]
        %v271 = vld [vmem:[%s181 + $0x8] sm:$0xf]
        %v272 = vld [vmem:[%s181 + $0xc] sm:$0xf]
        %v273 = vld [vmem:[%s181 + $0x10] sm:$0xf]
        %v274 = vld [vmem:[%s181 + $0x14] sm:$0xf]
        %v275 = vld [vmem:[%s181 + $0x18] sm:$0xf]
        %v276 = vld [vmem:[%s181 + $0x1c] sm:$0xf]
        %v277 = vlaneseq
        %v278 = vshrl.u32 %v277, 7
        %v279 = vsub.s32 0, %v278
        %v280 = vrot.slane %v243, %v279
        %v281 = vlaneseq
        %v282 = vshrl.u32 %v281, 7
        %v283 = vsub.s32 0, %v282
        %v284 = vrot.slane %v257, %v283
        %v285 = vlaneseq
        %v286 = vshrl.u32 %v285, 7
        %v287 = vsub.s32 0, %v286
        %v288 = vrot.slane %v265, %v287
        %v289 = vlaneseq
        %v290 = vshrl.u32 %v289, 7
        %v291 = vsub.s32 0, %v290
        %v292 = vrot.slane %v267, %v291
        %v293 = vlaneseq
        %v294 = vshrl.u32 %v293, 7
        %v295 = vsub.s32 0, %v294
        %v296 = vrot.slane %v250, %v295
        %v297 = vlaneseq
        %v298 = vshrl.u32 %v297, 7
        %v299 = vsub.s32 0, %v298
        %v300 = vrot.slane %v264, %v299
        %v301 = vlaneseq
        %v302 = vshrl.u32 %v301, 7
        %v303 = vsub.s32 0, %v302
        %v304 = vrot.slane %v266, %v303
        %v305 = vlaneseq
        %v306 = vshrl.u32 %v305, 7
        %v307 = vsub.s32 0, %v306
        %v308 = vrot.slane %v268, %v307
        %v317 = vadd.f32 %v269, %v280
        %v318 = vadd.f32 %v270, %v284
        %v319 = vadd.f32 %v271, %v288
        %v320 = vadd.f32 %v272, %v292
        %v321 = vadd.f32 %v273, %v296
        %v322 = vadd.f32 %v274, %v300
        %v323 = vadd.f32 %v275, %v304
        %v324 = vadd.f32 %v276, %v308
        %325 = vst [vmem:[%s215] sm:$0xf] %v317
        %326 = vst [vmem:[%s215 + $0x4] sm:$0xf] %v318
        %327 = vst [vmem:[%s215 + $0x8] sm:$0xf] %v319
        %328 = vst [vmem:[%s215 + $0xc] sm:$0xf] %v320
        %329 = vst [vmem:[%s215 + $0x10] sm:$0xf] %v321
        %330 = vst [vmem:[%s215 + $0x14] sm:$0xf] %v322
        %331 = vst [vmem:[%s215 + $0x18] sm:$0xf] %v323
        %332 = vst [vmem:[%s215 + $0x1c] sm:$0xf] %v324
        %s333 = sand.u32 %s98, 1
        %s334 = scalar_lea.sflag [#allocation4], %s333
        %s335 = sand.u32 %s98, 1
        %s336 = smul.addr %s335, 32
        %s337 = scalar_lea.vmem [#allocation7], %s336
        // Predicated region
        $region37: #{positional_encoding_forward.1} parent=27 // pred_check
          %p338 = pneg %p108
        $region38: #{positional_encoding_forward.1} parent=27 // pred_check_branch
          %340 = sbr.rel (%p338) target = $region40
        $region39: #{positional_encoding_forward.1} parent=27 // pred_region
          %s341 = smul.u32 8, %s26
          %s343 = ssub.s32 512, 512
          %344 = vsyncadd %s334, %s343
          %s345 = sadd.s32 %s27, %s341
          %s346 = smul.addr %s345, 64
          %s347 = scalar_lea.hbm %s2, %s346
          %s348 = sshll.u32 %s337, 4
          %s349 = int_to_ptr.vmem [resolvable:$true] %s348
          %354 = dma.vmem_to_hbm [thread:$0]  %s349, 512, %s347, %s334, 64, 64, 4
        $region40: #{positional_encoding_forward.1} parent=27 // pred_fallthru
          _
      $region28: #{positional_encoding_forward.1} parent=5 // pred_fallthru
        _
      %p355 = scmp.le.s32.totalorder 2, %s17
      // Predicated region
      $region41: #{positional_encoding_forward.1} parent=5 // pred_check
        %p356 = pneg %p355
      $region42: #{positional_encoding_forward.1} parent=5 // pred_check_branch
        %358 = sbr.rel (%p356) target = $region44
      $region43: #{positional_encoding_forward.1} parent=5 // pred_region
        %s359 = ssub.s32 %s17, 2
        // Predicated region
        $region45: #{positional_encoding_forward.1} parent=43 // pred_check
          %p360 = pneg %p114
        $region46: #{positional_encoding_forward.1} parent=43 // pred_check_branch
          %362 = sbr.rel (%p360) target = $region48
        $region47: #{positional_encoding_forward.1} parent=43 // pred_region
          %s363 = sand.u32 %s99, 1
          %s364 = scalar_lea.sflag [#allocation4], %s363
          %s365 = sand.u32 %s99, 1
          %s366 = smul.addr %s365, 32
          %s367 = scalar_lea.vmem [#allocation7], %s366
          %368 = dma.done %s364, 512
        $region48: #{positional_encoding_forward.1} parent=43 // pred_fallthru
          _
      $region44: #{positional_encoding_forward.1} parent=5 // pred_fallthru
        _
    $region6: #{positional_encoding_forward.1} parent=1 // loop_footer
      %s21 = sadd.s32 1, %s17
    $region7: #{positional_encoding_forward.1} parent=1 // loop_footer_branch
      %16 = sbr.rel target = $region3
    $region8: #{positional_encoding_forward.1} parent=1 // loop_exit
      _
    %369 = vsyncpa [#allocation3], 1
    %s370 = scalar_lea.sflag [#allocation3], 1
    %371 = vsyncpa %s370, 1
    %372 = vsyncpa [#allocation6], 1
    %s373 = scalar_lea.sflag [#allocation6], 1
    %374 = vsyncpa %s373, 1
    %375 = vsyncpa [#allocation4], 1
    %s376 = scalar_lea.sflag [#allocation4], 1
    %377 = vsyncpa %s376, 1

</llo_original>
